<compile_context>
chip_gen: v7x
topology: tpu7x:2x2x1
jax: 0.10.0
libtpu: 0.0.40
codegen_flags: <defaults>
</compile_context>

<pallas_src>
import jax
import jax.numpy as jnp
from jax.experimental import pallas as pl
from jax.experimental.pallas import tpu as pltpu

ALPHA = 0.5
GAMMA = 3


def _make_focal_ce_sum_kernel(n_valid: int, tile_rows: int, needs_mask: bool):
    """Builds the per-(split, tile) kernel; accumulates per-row CE sums."""

    def kernel(logits_ref, targets_ref, out_ref):
        # logits_ref:  (TN, C) native dtype
        # targets_ref: (TN, 1) int32
        # out_ref:     (1, 8, 128) f32, grid-resident per split
        #              (scalar partial sum broadcast across the block)
        i = pl.program_id(1)

        @pl.when(i == 0)
        def _init():
            out_ref[...] = jnp.zeros_like(out_ref)

        logits = logits_ref[...].astype(jnp.float32)              # (TN, C)
        tgt = targets_ref[...]                                    # (TN, 1) int32
        tn, c = logits.shape

        # Numerically stable per-row cross entropy on the max-shifted tile:
        #   ce_row = logsumexp(logits) - logits[target]
        m = jnp.max(logits, axis=-1, keepdims=True)               # (TN, 1)
        s = logits - m                                            # (TN, C)
        lse_s = jnp.log(jnp.sum(jnp.exp(s), axis=-1, keepdims=True))   # (TN, 1)

        col = jax.lax.broadcasted_iota(jnp.int32, (tn, c), 1)     # class ids
        picked_s = jnp.sum(jnp.where(col == tgt, s, 0.0),
                           axis=-1, keepdims=True)                # (TN, 1)

        ce_per = lse_s - picked_s                                 # (TN, 1)

        if needs_mask:
            # Mask rows beyond the true batch (padded / over-covered tiles).
            # Must stay AFTER the per-row CE so garbage rows are discarded.
            tile_idx = pl.program_id(0) * pl.num_programs(1) + i
            row = (jax.lax.broadcasted_iota(jnp.int32, (tn, 1), 0)
                   + tile_idx * tile_rows)
            ce_per = jnp.where(row < n_valid, ce_per, 0.0)

        out_ref[...] += jnp.sum(ce_per)                           # broadcast scalar add

    return kernel


def focal_loss(preds, targets, alpha=ALPHA, gamma=GAMMA, max_tile_rows=None):
    """preds: (N, C) float logits (any float dtype); targets: (N,) int class ids."""
    n, c = preds.shape
    targets_col = targets.astype(jnp.int32).reshape(n, 1)

    # ---- Tile sizing (dtype- and lane-padding-aware) ----------------------
    c_pad = max(128, ((c + 127) // 128) * 128)               # VMEM pads lanes to 128
    dtype_bytes = jnp.dtype(preds.dtype).itemsize
    rows_hbm = (4 * 1024 * 1024) // (c_pad * dtype_bytes)    # ~4 MiB DMA'd native tile
    rows_f32 = (2 * 1024 * 1024) // (c_pad * 4)              # f32 working tile <= ~2 MiB
    tile_rows = max(8, (min(rows_hbm, rows_f32) // 8) * 8)
    if max_tile_rows is not None:                            # test / tuning override
        tile_rows = max(8, min(tile_rows, (max_tile_rows // 8) * 8))
    if n <= 8:
        tile_rows = n                                        # single full-batch block
    else:
        tile_rows = min(tile_rows, (n // 8) * 8)             # multiple of 8, <= N

    tiles_total = pl.cdiv(n, tile_rows)
    # Leading "parallel" axis: sharded across v7x's two TensorCores; on 1-TC
    # chips (v5e/v6e) it just serializes at negligible per-step cost.
    num_splits = 2 if tiles_total >= 2 else 1
    tiles_per_split = pl.cdiv(tiles_total, num_splits)
    needs_mask = (num_splits * tiles_per_split * tile_rows) != n
    last_block = tiles_total - 1

    def _in_map(p, i):
        # Clamp so an over-covering grid point never DMAs out of bounds; its
        # contribution is discarded by the in-kernel row mask.
        return (jnp.minimum(p * tiles_per_split + i, last_block), 0)

    kernel = _make_focal_ce_sum_kernel(n, tile_rows, needs_mask)

    partials = pl.pallas_call(
        kernel,
        out_shape=jax.ShapeDtypeStruct((num_splits, 8, 128), jnp.float32),
        grid_spec=pltpu.PrefetchScalarGridSpec(
            num_scalar_prefetch=0,
            grid=(num_splits, tiles_per_split),
            in_specs=[
                pl.BlockSpec((tile_rows, c), _in_map),       # logits tile (native dtype)
                pl.BlockSpec((tile_rows, 1), _in_map),       # target ids
            ],
            out_specs=pl.BlockSpec((1, 8, 128), lambda p, i: (p, 0, 0)),
        ),
        compiler_params=pltpu.CompilerParams(
            dimension_semantics=("parallel", "arbitrary"),
            vmem_limit_bytes=32 * 1024 * 1024,               # safe on v5e/v6e/v7x
        ),
    )(preds, targets_col)

    # Scalar epilogue (negligible): mean CE, then the module's focal transform.
    ce = jnp.sum(partials[:, 0, 0]) / jnp.float32(n)
    pt = jnp.exp(-ce)
    return jnp.float32(alpha) * (1.0 - pt) ** gamma * ce


def _focal_loss_ref(preds, targets, alpha=ALPHA, gamma=GAMMA):
    # Pure-JAX reference for sanity checking.
    logits = preds.astype(jnp.float32)
    lse = jax.scipy.special.logsumexp(logits, axis=-1)
    picked = jnp.take_along_axis(
        logits, targets[:, None].astype(jnp.int32), axis=-1)[:, 0]
    ce = jnp.mean(lse - picked)
    pt = jnp.exp(-ce)
    return alpha * (1.0 - pt) ** gamma * ce


if __name__ == "__main__":
    key = jax.random.PRNGKey(0)
    k1, k2, k3, k4 = jax.random.split(key, 4)

    # Case 1: single-tile path (batch=8, classes=16).
    n1, c1 = 8, 16
    preds1 = jax.random.normal(k1, (n1, c1), dtype=jnp.float32)
    tgts1 = jax.random.randint(k2, (n1,), 0, c1, dtype=jnp.int32)
    loss1 = focal_loss(preds1, tgts1)
    jax.block_until_ready(loss1)
    ref1 = _focal_loss_ref(preds1, tgts1)
    assert jnp.allclose(loss1, ref1, rtol=1e-5, atol=1e-5), (loss1, ref1)

    # Case 2: exercises the 2-way parallel split, block-index clamping, and
    # the partial-tile mask (batch=36, forced 16-row tile -> grid (2, 2)
    # covering 3 real tiles).
    n2, c2 = 36, 16
    preds2 = jax.random.normal(k3, (n2, c2), dtype=jnp.float32)
    tgts2 = jax.random.randint(k4, (n2,), 0, c2, dtype=jnp.int32)
    loss2 = focal_loss(preds2, tgts2, max_tile_rows=16)
    jax.block_until_ready(loss2)
    ref2 = _focal_loss_ref(preds2, tgts2)
    assert jnp.allclose(loss2, ref2, rtol=1e-5, atol=1e-5), (loss2, ref2)

    print("KERNEL_OK")
</pallas_src>

<mosaic_0001>
module attributes {stable_mosaic.version = 11 : i64} {
  func.func @kernel(%arg0: i32, %arg1: i32, %arg2: memref<8x16xf32, #tpu.memory_space<vmem>>, %arg3: memref<8x1xi32, #tpu.memory_space<vmem>>, %arg4: memref<1x8x128xf32, #tpu.memory_space<vmem>>) attributes {dimension_semantics = [#tpu.dimension_semantics<parallel>, #tpu.dimension_semantics<arbitrary>], iteration_bounds = array<i64: 1, 1>, scalar_prefetch = 0 : i64, scratch_operands = 0 : i64, tpu.core_type = #tpu.core_type<tc>, window_params = [{transform_indices = @transform_0, window_bounds = array<i64: 8, 16>}, {transform_indices = @transform_1, window_bounds = array<i64: 8, 1>}, {transform_indices = @transform_2, window_bounds = array<i64: 1, 8, 128>}]} {
    %c0_i32 = arith.constant 0 : i32
    %0 = arith.cmpi eq, %arg1, %c0_i32 : i32
    %1 = arith.extui %0 : i1 to i32
    %c0_i32_0 = arith.constant 0 : i32
    %2 = arith.cmpi ne, %1, %c0_i32_0 : i32
    scf.if %2 {
      %cst_14 = arith.constant 0.000000e+00 : f32
      %29 = vector.broadcast %cst_14 : f32 to vector<1x8x128xf32>
      %c0_15 = arith.constant 0 : index
      %c0_16 = arith.constant 0 : index
      %c0_17 = arith.constant 0 : index
      %30 = vector.load %arg4[%c0_15, %c0_16, %c0_17] : memref<1x8x128xf32, #tpu.memory_space<vmem>>, vector<1x8x128xf32>
      tpu.vector_store %arg4[%c0_15, %c0_16, %c0_17], %29 {strides = array<i32>} : memref<1x8x128xf32, #tpu.memory_space<vmem>>, vector<1x8x128xf32>,
    } else {
    }
    %c0 = arith.constant 0 : index
    %c0_1 = arith.constant 0 : index
    %3 = vector.load %arg2[%c0, %c0_1] : memref<8x16xf32, #tpu.memory_space<vmem>>, vector<8x16xf32>
    %c0_2 = arith.constant 0 : index
    %c0_3 = arith.constant 0 : index
    %4 = vector.load %arg3[%c0_2, %c0_3] : memref<8x1xi32, #tpu.memory_space<vmem>>, vector<8x1xi32>
    %cst = arith.constant dense<0xFF800000> : vector<8xf32>
    %5 = vector.multi_reduction <maximumf>, %3, %cst [1] : vector<8x16xf32> to vector<8xf32>
    %6 = vector.shape_cast %5 : vector<8xf32> to vector<8x1xf32>
    %7 = vector.broadcast %6 : vector<8x1xf32> to vector<8x16xf32>
    %8 = arith.subf %3, %7 : vector<8x16xf32>
    %9 = math.exp %8 : vector<8x16xf32>
    %cst_4 = arith.constant dense<0.000000e+00> : vector<8xf32>
    %10 = vector.multi_reduction <add>, %9, %cst_4 [1] : vector<8x16xf32> to vector<8xf32>
    %11 = vector.shape_cast %10 : vector<8xf32> to vector<8x1xf32>
    %12 = math.log %11 : vector<8x1xf32>
    %13 = tpu.iota {dimensions = array<i32: 1>} : vector<8x16xi32>
    %14 = vector.broadcast %4 : vector<8x1xi32> to vector<8x16xi32>
    %15 = arith.cmpi eq, %13, %14 : vector<8x16xi32>
    %cst_5 = arith.constant 0.000000e+00 : f32
    %16 = vector.broadcast %cst_5 : f32 to vector<8x16xf32>
    %17 = arith.select %15, %8, %16 : vector<8x16xi1>, vector<8x16xf32>
    %cst_6 = arith.constant dense<0.000000e+00> : vector<8xf32>
    %18 = vector.multi_reduction <add>, %17, %cst_6 [1] : vector<8x16xf32> to vector<8xf32>
    %19 = vector.shape_cast %18 : vector<8xf32> to vector<8x1xf32>
    %20 = arith.subf %12, %19 : vector<8x1xf32>
    %c0_7 = arith.constant 0 : index
    %c0_8 = arith.constant 0 : index
    %c0_9 = arith.constant 0 : index
    %21 = vector.load %arg4[%c0_7, %c0_8, %c0_9] : memref<1x8x128xf32, #tpu.memory_space<vmem>>, vector<1x8x128xf32>
    %22 = vector.shape_cast %20 : vector<8x1xf32> to vector<1x8x1xf32>
    %cst_10 = arith.constant dense<0.000000e+00> : vector<1xf32>
    %23 = vector.multi_reduction <add>, %22, %cst_10 [1, 2] : vector<1x8x1xf32> to vector<1xf32>
    %24 = vector.shape_cast %23 : vector<1xf32> to vector<1x1x1xf32>
    %25 = vector.extract %24[0, 0, 0] : f32 from vector<1x1x1xf32>
    %26 = vector.broadcast %25 : f32 to vector<1x8x128xf32>
    %27 = arith.addf %21, %26 : vector<1x8x128xf32>
    %c0_11 = arith.constant 0 : index
    %c0_12 = arith.constant 0 : index
    %c0_13 = arith.constant 0 : index
    %28 = vector.load %arg4[%c0_11, %c0_12, %c0_13] : memref<1x8x128xf32, #tpu.memory_space<vmem>>, vector<1x8x128xf32>
    tpu.vector_store %arg4[%c0_11, %c0_12, %c0_13], %27 {strides = array<i32>} : memref<1x8x128xf32, #tpu.memory_space<vmem>>, vector<1x8x128xf32>,
    return
  }
  func.func @transform_0(%arg0: i32, %arg1: i32) -> (i32, i32) {
    %c1_i32 = arith.constant 1 : i32
    %0 = arith.muli %arg0, %c1_i32 : i32
    %1 = arith.addi %0, %arg1 : i32
    %c0_i32 = arith.constant 0 : i32
    %2 = arith.minsi %1, %c0_i32 : i32
    %c0_i32_0 = arith.constant 0 : i32
    %c0_i32_1 = arith.constant 0 : i32
    return %2, %c0_i32_0 : i32, i32
  }
  func.func @transform_1(%arg0: i32, %arg1: i32) -> (i32, i32) {
    %c1_i32 = arith.constant 1 : i32
    %0 = arith.muli %arg0, %c1_i32 : i32
    %1 = arith.addi %0, %arg1 : i32
    %c0_i32 = arith.constant 0 : i32
    %2 = arith.minsi %1, %c0_i32 : i32
    %c0_i32_0 = arith.constant 0 : i32
    %c0_i32_1 = arith.constant 0 : i32
    return %2, %c0_i32_0 : i32, i32
  }
  func.func @transform_2(%arg0: i32, %arg1: i32) -> (i32, i32, i32) {
    %c0_i32 = arith.constant 0 : i32
    %c0_i32_0 = arith.constant 0 : i32
    %c0_i32_1 = arith.constant 0 : i32
    return %arg0, %c0_i32, %c0_i32_0 : i32, i32, i32
  }
}

</mosaic_0001>

<llo_original>
// kernel: tpu_custom_call.1
$region0: #{tpu_custom_call.1}
  #allocation0 [shape = 'u32[]', space=smem, size = 0x4, offset = 0x4, fixed_abs, tag = 'smem constant byte address 0x4 - core index']
  #allocation1 [shape = 'u32[144,128]{1,0:T(1,128)}', space=vmem, size = 0x12000, scoped, tag = 'internal scratch']
  %s0 = inlined_call_operand.vmem [shape: f32[8,16], index: 0, kind: input, shape index: {}]
  %s1 = inlined_call_operand.vmem [shape: s32[8,1], index: 1, kind: input, shape index: {}]
  %s2 = inlined_call_operand.hbm [shape: f32[1,8,128], index: 2, kind: output, shape index: {}]
  %s3 = sld [smem:[#allocation0]]
  $region22: #{tpu_custom_call.1} parent=0
    _
  %s5 = ssub.s32 1, %s3
  %s6 = scalar_select 0, %s5, %s3
  $region1: #{tpu_custom_call.1} parent=0
    #allocation2 [shape = 'u8[4096]{0}', space=vmem, size = 0x1000, scoped, tag = 'output window, operand 0, single buffered']
    #allocation3 [shape = 's32[1]{0}', space=sflag, size = 0x4, scoped, tag = 'scoped memory for tpu_custom_call.1']
    %7 = vsyncpa [#allocation3], 0
    // Predicated region
    $region2: #{tpu_custom_call.1} parent=1 // pred_check
      _
    $region3: #{tpu_custom_call.1} parent=1 // pred_check_branch
      %9 = sbr.rel (0) target = $region5
    $region4: #{tpu_custom_call.1} parent=1 // pred_region
      %s10 = sadd.s32 0, 0
      %p11 = scmp.lt.s32.totalorder %s10, 0
      %s12 = scalar_select %p11, %s10, 0
      %p13 = scmp.lt.s32.totalorder %s12, 0
      %s14 = scalar_select %p13, %s12, 0
      %s15 = smul.addr %s14, 8
      %s16 = scalar_lea.vmem %s0, %s15
      %s17 = sadd.s32 0, 0
      %p18 = scmp.lt.s32.totalorder %s17, 0
      %s19 = scalar_select %p18, %s17, 0
    $region5: #{tpu_custom_call.1} parent=1 // pred_fallthru
      _
    // Predicated region
    $region6: #{tpu_custom_call.1} parent=1 // pred_check
      _
    $region7: #{tpu_custom_call.1} parent=1 // pred_check_branch
      %21 = sbr.rel (0) target = $region9
    $region8: #{tpu_custom_call.1} parent=1 // pred_region
      %s22 = sadd.s32 0, 0
      %p23 = scmp.lt.s32.totalorder %s22, 0
      %s24 = scalar_select %p23, %s22, 0
      %p25 = scmp.lt.s32.totalorder %s24, 0
      %s26 = scalar_select %p25, %s24, 0
      %s27 = smul.addr %s26, 8
      %s28 = scalar_lea.vmem %s1, %s27
      %s29 = sadd.s32 0, 0
      %p30 = scmp.lt.s32.totalorder %s29, 0
      %s31 = scalar_select %p30, %s29, 0
    $region9: #{tpu_custom_call.1} parent=1 // pred_fallthru
      _
    %s32 = sadd.s32 0, 0
    %p33 = scmp.lt.s32.totalorder %s32, 0
    %s34 = scalar_select %p33, %s32, 0
    %p35 = scmp.lt.s32.totalorder %s34, 0
    %s36 = scalar_select %p35, %s34, 0
    %s37 = smul.addr %s36, 8
    %s38 = scalar_lea.vmem %s0, %s37
    %s39 = sadd.s32 0, 0
    %p40 = scmp.lt.s32.totalorder %s39, 0
    %s41 = scalar_select %p40, %s39, 0
    %p42 = scmp.lt.s32.totalorder %s41, 0
    %s43 = scalar_select %p42, %s41, 0
    %s44 = smul.addr %s43, 8
    %s45 = scalar_lea.vmem %s1, %s44
    %s46 = sadd.s32 0, 0
    %p47 = scmp.lt.s32.totalorder %s46, 0
    %s48 = scalar_select %p47, %s46, 0
    %p49 = scmp.lt.s32.totalorder %s48, 0
    %s50 = scalar_select %p49, %s48, 0
    %s51 = smul.addr %s50, 8
    %s52 = scalar_lea.vmem %s0, %s51
    %s53 = sadd.s32 0, 0
    %p54 = scmp.lt.s32.totalorder %s53, 0
    %s55 = scalar_select %p54, %s53, 0
    %s56 = sadd.s32 0, 0
    %p57 = scmp.lt.s32.totalorder %s56, 0
    %s58 = scalar_select %p57, %s56, 0
    %p59 = scmp.lt.s32.totalorder %s58, 0
    %s60 = scalar_select %p59, %s58, 0
    %s61 = smul.addr %s60, 8
    %s62 = scalar_lea.vmem %s1, %s61
    %s63 = sadd.s32 0, 0
    %p64 = scmp.lt.s32.totalorder %s63, 0
    %s65 = scalar_select %p64, %s63, 0
    %p66 = scmp.eq.s32.totalorder 0, 0
    // Predicated region
    $region10: #{tpu_custom_call.1} parent=1 // pred_check
      %p67 = pneg %p66
    $region11: #{tpu_custom_call.1} parent=1 // pred_check_branch
      %69 = sbr.rel (%p67) target = $region13
    $region12: #{tpu_custom_call.1} parent=1 // pred_region
      %70 = vst [vmem:[#allocation2] sm:$0xff] 0.0
    $region13: #{tpu_custom_call.1} parent=1 // pred_fallthru
      _
    %v71 = vld [vmem:[%s52] sm:$0xff]
    %v72 = vld [vmem:[%s62] sm:$0xff]
    %vm73 = vcmask 130048
    %v74 = vsel %vm73, %v71, -inf
    %75 = vmax.xlane.f32.xlu0 %v74
    %v76 = vpop.xlane.xlu0 %75
    %v77 = vsub.f32 %v71, %v76
    %v78 = vmul.f32 %v77, 1.442695
    %v79 = vpow.pop %v78
    %v80 = vsel %vm73, %v79, 0.0
    %81 = vadd.xlane.f32.xlu0 %v80
    %v82 = vpop.xlane.xlu0 %81
    %v83 = vlog2.pop %v82
    %v84 = vmul.f32 %v83, 0.6931472
    %v85 = vlaneseq
    %v86 = vand.u32 %v85, 127
    %87 = vset.pattern.permute.xlu0 0
    %88 = vperm.xlu0 %87, %v72
    %v89 = vpop.permute.xlu0 %88
    %vm90 = vcmp.eq.s32.totalorder %v86, %v89
    %v91 = vsel %vm90, %v77, 0.0
    %v92 = vsel %vm73, %v91, 0.0
    %93 = vadd.xlane.f32.xlu0 %v92
    %v94 = vpop.xlane.xlu0 %93
    %v95 = vsub.f32 %v84, %v94
    %v96 = vld [vmem:[#allocation2] sm:$0xff]
    %vm97 = vcmask 7168
    %v98 = vsel %vm97, %v95, 0.0
    %99 = vadd.xlane.f32.xlu0 %v98
    %v100 = vpop.xlane.xlu0 %99
    %v101 = vrot.slane %v100, 4
    %v102 = vadd.f32 %v100, %v101
    %v103 = vrot.slane %v102, 2
    %v104 = vadd.f32 %v102, %v103
    %v105 = vrot.slane %v104, 1
    %v106 = vadd.f32 %v104, %v105
    %s107 = vtos %v106
    %v108 = vstv %s107
    %v109 = vadd.f32 %v96, %v108
    %110 = vst [vmem:[#allocation2] sm:$0xff] %v109
    // Predicated region
    $region14: #{tpu_custom_call.1} parent=1 // pred_check
      _
    $region15: #{tpu_custom_call.1} parent=1 // pred_check_branch
      %112 = sbr.rel (0) target = $region17
    $region16: #{tpu_custom_call.1} parent=1 // pred_region
      %s114 = ssub.s32 128, 128
      %115 = vsyncadd [#allocation3], %s114
      %s117 = sshll.u32 [#allocation2], 4
      %s118 = int_to_ptr.vmem [resolvable:$true] %s117
      %120 = dma.vmem_to_hbm [thread:$0]  %s118, 128, %s2, [#allocation3]
    $region17: #{tpu_custom_call.1} parent=1 // pred_fallthru
      _
    // Predicated region
    $region18: #{tpu_custom_call.1} parent=1 // pred_check
      _
    $region19: #{tpu_custom_call.1} parent=1 // pred_check_branch
      %122 = sbr.rel (0) target = $region21
    $region20: #{tpu_custom_call.1} parent=1 // pred_region
      %123 = dma.done [#allocation3], 128
    $region21: #{tpu_custom_call.1} parent=1 // pred_fallthru
      _
    %124 = vsyncpa [#allocation3], 1

</llo_original>
